<compile_context>
chip_gen: v7x
topology: tpu7x:2x2x1
jax: 0.10.0
libtpu: 0.0.40
codegen_flags: <defaults>
</compile_context>

<pallas_src>
from functools import partial

import jax
import jax.numpy as jnp
import numpy as np
from jax import lax
from jax.experimental import pallas as pl
from jax.experimental.pallas import tpu as pltpu


# ---------------------------------------------------------------------------
# Pallas kernel: conv-as-matmul (transposed, lane-dense) + per-(n, s) stats
#   w_ref   : (CO, K)          resident weights
#   p_ref   : (K, tile_s)      im2col patch tile for (batch n, spatial block s)
#   y_ref   : (CO, tile_s)     conv output tile (y transposed, lane-dense)
#   sum_ref : (CO, 1)          per-(n, s) partial channel sum
#   sq_ref  : (CO, 1)          per-(n, s) partial channel sum of squares
# Fully data-parallel over the grid (no accumulators) -> both axes "parallel".
# ---------------------------------------------------------------------------
def conv_stats_kernel(w_ref, p_ref, y_ref, sum_ref, sq_ref):
    # (CO, K) @ (K, tile_s) -> (CO, tile_s), f32 accumulation on the MXU.
    y = jnp.dot(w_ref[...], p_ref[...], preferred_element_type=jnp.float32)
    y_ref[...] = y
    sum_ref[...] = jnp.sum(y, axis=1, keepdims=True)
    sq_ref[...] = jnp.sum(y * y, axis=1, keepdims=True)


def _round_up(x, m):
    return (x + m - 1) // m * m


def _pick_tile_s(S, target):
    """Lane-dense tile (multiple of 128) over the flattened output-spatial axis.

    S is later padded up to a multiple of the tile, so awkward S never falls back
    to one huge (K, S) block that would blow the scoped VMEM budget.
    """
    target = max(128, (target // 128) * 128)
    return min(target, _round_up(S, 128))


@partial(jax.jit, static_argnames=("eps", "tile_s_target", "compute_dtype"))
def conv_down_pallas(x, weight, bias, gamma, beta, eps=1e-5,
                     tile_s_target=2048, compute_dtype=jnp.float32):
    """x: (N, CI, D, H, W) f32.  weight: (CO, CI, 3, 3, 3).  Returns (N, CO, OD, OH, OW)."""
    N, CI, D, H, W = x.shape
    CO = weight.shape[0]
    # conv3d k=3, s=2, p=1 (handles odd spatial dims too)
    OD, OH, OW = (D + 1) // 2, (H + 1) // 2, (W + 1) // 2
    S = OD * OH * OW                       # real output positions per batch element
    K = CI * 27                            # contraction dim — NOT padded in HBM

    tile_s = _pick_tile_s(S, tile_s_target)
    Sp = _round_up(S, tile_s)              # padded spatial extent (zero columns)
    SB = Sp // tile_s                      # number of spatial blocks
    grid = (N, SB)

    # ---- glue: im2col in the transposed (N, K, S) layout (XLA fuses the taps) ----
    xp = jnp.pad(x, ((0, 0), (0, 0), (1, 1), (1, 1), (1, 1)))
    taps = []
    for kd in range(3):
        for kh in range(3):
            for kw in range(3):
                taps.append(
                    xp[:, :,
                       kd:kd + 2 * OD - 1:2,
                       kh:kh + 2 * OH - 1:2,
                       kw:kw + 2 * OW - 1:2])
    pat = jnp.stack(taps, axis=2)                       # (N, CI, 27, OD, OH, OW)
    pat = pat.reshape(N, K, S).astype(compute_dtype)    # K ordered (ci, kd, kh, kw)
    if Sp > S:
        # zero patch columns -> y == 0 there -> stats unaffected; tail sliced off below
        pat = jnp.pad(pat, ((0, 0), (0, 0), (0, Sp - S)))

    # NOTE: the conv bias is intentionally NOT applied — train-mode BatchNorm
    # subtracts the batch mean, so a per-channel constant cancels exactly and
    # leaves the variance unchanged.  (kept in the signature for API parity)
    del bias
    w_mat = weight.reshape(CO, K).astype(compute_dtype)  # (CO, K)

    # ---- VMEM budget (explicit; sized for v7x's smaller VMEM as well) ----
    itemsize = jnp.dtype(compute_dtype).itemsize
    blk_bytes = (K * tile_s * itemsize        # patch tile
                 + CO * K * itemsize          # resident weights
                 + CO * tile_s * 4            # y tile (f32)
                 + 2 * CO * 4)                # per-block stats
    vmem_limit_bytes = int(min(max(4 * blk_bytes, 8 << 20), 32 << 20))

    # ---- Pallas: conv matmul + per-(n, s-block) partial stats ----
    y_t, psum, psq = pl.pallas_call(
        conv_stats_kernel,
        out_shape=(
            jax.ShapeDtypeStruct((N, CO, Sp), jnp.float32),      # y transposed
            jax.ShapeDtypeStruct((N, SB, CO, 1), jnp.float32),   # partial channel sum
            jax.ShapeDtypeStruct((N, SB, CO, 1), jnp.float32),   # partial channel sum^2
        ),
        grid_spec=pltpu.PrefetchScalarGridSpec(
            num_scalar_prefetch=0,
            grid=grid,
            in_specs=[
                pl.BlockSpec((CO, K), lambda n, s: (0, 0)),               # weights
                pl.BlockSpec((None, K, tile_s), lambda n, s: (n, 0, s)),  # patches
            ],
            out_specs=[
                pl.BlockSpec((None, CO, tile_s), lambda n, s: (n, 0, s)),
                pl.BlockSpec((None, None, CO, 1), lambda n, s: (n, s, 0, 0)),
                pl.BlockSpec((None, None, CO, 1), lambda n, s: (n, s, 0, 0)),
            ],
        ),
        compiler_params=pltpu.CompilerParams(
            # Every grid step writes disjoint output blocks -> both axes parallel
            # (v7x megacore shards batch AND spatial work across its 2 TensorCores).
            dimension_semantics=("parallel", "parallel"),
            vmem_limit_bytes=vmem_limit_bytes),
    )(w_mat, pat)

    # ---- glue: batch-norm (training-mode batch statistics) + ReLU epilogue ----
    # Tiny per-channel math + one elementwise pass; XLA fuses it with the slice
    # and the (free) reshape to NCDHW — no second Pallas pass, no extra transpose.
    M = N * S                                              # real positions only
    ch_sum = jnp.sum(psum, axis=(0, 1))                    # (CO, 1)
    ch_sq = jnp.sum(psq, axis=(0, 1))                      # (CO, 1)
    mean = ch_sum / M
    var = jnp.maximum(ch_sq / M - mean * mean, 0.0)        # biased batch variance
    inv_std = lax.rsqrt(var + eps)
    scale = gamma.reshape(CO, 1) * inv_std
    shift = beta.reshape(CO, 1) - mean * scale

    out = jnp.maximum(y_t * scale[None, :, :] + shift[None, :, :], 0.0)
    out = out[:, :, :S]                                    # drop zero-padded tail
    return out.reshape(N, CO, OD, OH, OW)


# ---------------------------------------------------------------------------
# Pure-JAX reference (for correctness check)
# ---------------------------------------------------------------------------
def conv_down_ref(x, weight, bias, gamma, beta, eps=1e-5):
    y = lax.conv_general_dilated(
        x, weight, window_strides=(2, 2, 2),
        padding=[(1, 1), (1, 1), (1, 1)],
        dimension_numbers=("NCDHW", "OIDHW", "NCDHW"))
    y = y + bias.reshape(1, -1, 1, 1, 1)
    mean = jnp.mean(y, axis=(0, 2, 3, 4), keepdims=True)
    var = jnp.mean((y - mean) ** 2, axis=(0, 2, 3, 4), keepdims=True)
    y = (y - mean) / jnp.sqrt(var + eps)
    y = y * gamma.reshape(1, -1, 1, 1, 1) + beta.reshape(1, -1, 1, 1, 1)
    return jnp.maximum(y, 0.0)


if __name__ == "__main__":
    key = jax.random.PRNGKey(0)
    N, CI, CO, D, H, W = 2, 4, 8, 16, 16, 16

    k_x, k_w, k_b = jax.random.split(key, 3)
    x = jax.random.normal(k_x, (N, CI, D, H, W), dtype=jnp.float32)
    # deterministic parameter init (synthetic, not a checkpoint load)
    fan_in = CI * 27
    weight = jax.random.normal(k_w, (CO, CI, 3, 3, 3), dtype=jnp.float32) / np.sqrt(fan_in)
    bias = jax.random.normal(k_b, (CO,), dtype=jnp.float32) * 0.1
    gamma = jnp.ones((CO,), dtype=jnp.float32)   # BatchNorm default init
    beta = jnp.zeros((CO,), dtype=jnp.float32)

    ref = conv_down_ref(x, weight, bias, gamma, beta)

    # f32 path: exact parity with the PyTorch module
    out = jax.block_until_ready(conv_down_pallas(x, weight, bias, gamma, beta))
    np.testing.assert_allclose(np.asarray(out), np.asarray(ref), rtol=1e-4, atol=1e-4)

    # bf16 fast path (halves the dominant patch/weight HBM stream, native MXU rate);
    # flagged numerics tradeoff -> looser tolerance.
    out_bf16 = jax.block_until_ready(
        conv_down_pallas(x, weight, bias, gamma, beta, compute_dtype=jnp.bfloat16))
    np.testing.assert_allclose(np.asarray(out_bf16), np.asarray(ref), rtol=5e-2, atol=5e-2)

    print("KERNEL_OK")
</pallas_src>

<mosaic_0001>
module attributes {stable_mosaic.version = 11 : i64} {
  func.func @conv_stats_kernel(%arg0: i32, %arg1: i32, %arg2: memref<8x108xf32, #tpu.memory_space<vmem>>, %arg3: memref<1x108x512xf32, #tpu.memory_space<vmem>>, %arg4: memref<1x8x512xf32, #tpu.memory_space<vmem>>, %arg5: memref<1x1x8x1xf32, #tpu.memory_space<vmem>>, %arg6: memref<1x1x8x1xf32, #tpu.memory_space<vmem>>) attributes {dimension_semantics = [#tpu.dimension_semantics<parallel>, #tpu.dimension_semantics<parallel>], iteration_bounds = array<i64: 2, 1>, scalar_prefetch = 0 : i64, scratch_operands = 0 : i64, tpu.core_type = #tpu.core_type<tc>, window_params = [{pipeline_mode = #tpu.pipeline_mode<synchronous>, transform_indices = @transform_0, window_bounds = array<i64: 8, 108>}, {transform_indices = @transform_1, window_bounds = array<i64: 1, 108, 512>}, {transform_indices = @transform_2, window_bounds = array<i64: 1, 8, 512>}, {transform_indices = @transform_3, window_bounds = array<i64: 1, 1, 8, 1>}, {transform_indices = @transform_4, window_bounds = array<i64: 1, 1, 8, 1>}]} {
    %c0 = arith.constant 0 : index
    %c0_0 = arith.constant 0 : index
    %0 = vector.load %arg2[%c0, %c0_0] : memref<8x108xf32, #tpu.memory_space<vmem>>, vector<8x108xf32>
    %c0_1 = arith.constant 0 : index
    %c0_2 = arith.constant 0 : index
    %c0_3 = arith.constant 0 : index
    %1 = vector.load %arg3[%c0_1, %c0_2, %c0_3] : memref<1x108x512xf32, #tpu.memory_space<vmem>>, vector<1x108x512xf32>
    %2 = vector.shape_cast %1 : vector<1x108x512xf32> to vector<108x512xf32>
    %cst = arith.constant dense<0.000000e+00> : vector<8x512xf32>
    %3 = tpu.matmul %0, %2, %cst {dimension_numbers = #tpu.dot_dimension_numbers<[1], [0], [0], [1], [0, 0, 1, 1], [], []>} : vector<8x108xf32>, vector<108x512xf32>, vector<8x512xf32> -> vector<8x512xf32>
    %c0_4 = arith.constant 0 : index
    %c0_5 = arith.constant 0 : index
    %c0_6 = arith.constant 0 : index
    %4 = vector.load %arg4[%c0_4, %c0_5, %c0_6] : memref<1x8x512xf32, #tpu.memory_space<vmem>>, vector<1x8x512xf32>
    %5 = vector.shape_cast %4 : vector<1x8x512xf32> to vector<8x512xf32>
    %6 = vector.shape_cast %3 : vector<8x512xf32> to vector<1x8x512xf32>
    tpu.vector_store %arg4[%c0_4, %c0_5, %c0_6], %6 {strides = array<i32>} : memref<1x8x512xf32, #tpu.memory_space<vmem>>, vector<1x8x512xf32>,
    %cst_7 = arith.constant dense<0.000000e+00> : vector<8xf32>
    %7 = vector.multi_reduction <add>, %3, %cst_7 [1] : vector<8x512xf32> to vector<8xf32>
    %8 = vector.shape_cast %7 : vector<8xf32> to vector<8x1xf32>
    %c0_8 = arith.constant 0 : index
    %c0_9 = arith.constant 0 : index
    %c0_10 = arith.constant 0 : index
    %c0_11 = arith.constant 0 : index
    %9 = vector.load %arg5[%c0_8, %c0_9, %c0_10, %c0_11] : memref<1x1x8x1xf32, #tpu.memory_space<vmem>>, vector<1x1x8x1xf32>
    %10 = vector.shape_cast %9 : vector<1x1x8x1xf32> to vector<8x1xf32>
    %11 = vector.shape_cast %8 : vector<8x1xf32> to vector<1x1x8x1xf32>
    tpu.vector_store %arg5[%c0_8, %c0_9, %c0_10, %c0_11], %11 {strides = array<i32>} : memref<1x1x8x1xf32, #tpu.memory_space<vmem>>, vector<1x1x8x1xf32>,
    %12 = arith.mulf %3, %3 : vector<8x512xf32>
    %cst_12 = arith.constant dense<0.000000e+00> : vector<8xf32>
    %13 = vector.multi_reduction <add>, %12, %cst_12 [1] : vector<8x512xf32> to vector<8xf32>
    %14 = vector.shape_cast %13 : vector<8xf32> to vector<8x1xf32>
    %c0_13 = arith.constant 0 : index
    %c0_14 = arith.constant 0 : index
    %c0_15 = arith.constant 0 : index
    %c0_16 = arith.constant 0 : index
    %15 = vector.load %arg6[%c0_13, %c0_14, %c0_15, %c0_16] : memref<1x1x8x1xf32, #tpu.memory_space<vmem>>, vector<1x1x8x1xf32>
    %16 = vector.shape_cast %15 : vector<1x1x8x1xf32> to vector<8x1xf32>
    %17 = vector.shape_cast %14 : vector<8x1xf32> to vector<1x1x8x1xf32>
    tpu.vector_store %arg6[%c0_13, %c0_14, %c0_15, %c0_16], %17 {strides = array<i32>} : memref<1x1x8x1xf32, #tpu.memory_space<vmem>>, vector<1x1x8x1xf32>,
    return
  }
  func.func @transform_0(%arg0: i32, %arg1: i32) -> (i32, i32) {
    %c0_i32 = arith.constant 0 : i32
    %c0_i32_0 = arith.constant 0 : i32
    %c0_i32_1 = arith.constant 0 : i32
    return %c0_i32, %c0_i32_0 : i32, i32
  }
  func.func @transform_1(%arg0: i32, %arg1: i32) -> (i32, i32, i32) {
    %c0_i32 = arith.constant 0 : i32
    %c0_i32_0 = arith.constant 0 : i32
    return %arg0, %c0_i32, %arg1 : i32, i32, i32
  }
  func.func @transform_2(%arg0: i32, %arg1: i32) -> (i32, i32, i32) {
    %c0_i32 = arith.constant 0 : i32
    %c0_i32_0 = arith.constant 0 : i32
    return %arg0, %c0_i32, %arg1 : i32, i32, i32
  }
  func.func @transform_3(%arg0: i32, %arg1: i32) -> (i32, i32, i32, i32) {
    %c0_i32 = arith.constant 0 : i32
    %c0_i32_0 = arith.constant 0 : i32
    %c0_i32_1 = arith.constant 0 : i32
    return %arg0, %arg1, %c0_i32, %c0_i32_0 : i32, i32, i32, i32
  }
  func.func @transform_4(%arg0: i32, %arg1: i32) -> (i32, i32, i32, i32) {
    %c0_i32 = arith.constant 0 : i32
    %c0_i32_0 = arith.constant 0 : i32
    %c0_i32_1 = arith.constant 0 : i32
    return %arg0, %arg1, %c0_i32, %c0_i32_0 : i32, i32, i32, i32
  }
}

</mosaic_0001>

<llo_original>
// kernel: conv_down_pallas.1
$region0: #{conv_down_pallas.1}
  #allocation0 [shape = 'u32[]', space=smem, size = 0x4, offset = 0x4, fixed_abs, tag = 'smem constant byte address 0x4 - core index']
  #allocation1 [shape = 'u32[144,128]{1,0:T(1,128)}', space=vmem, size = 0x12000, scoped, tag = 'internal scratch']
  %s0 = inlined_call_operand.vmem [shape: f32[8,108], index: 0, kind: input, shape index: {}]
  %s1 = inlined_call_operand.vmem [shape: f32[2,108,512], index: 1, kind: input, shape index: {}]
  %s2 = inlined_call_operand.vmem [shape: f32[2,8,512], index: 2, kind: output, shape index: {0}]
  %s3 = inlined_call_operand.vmem [shape: f32[2,1,8,1], index: 3, kind: output, shape index: {1}]
  %s4 = inlined_call_operand.vmem [shape: f32[2,1,8,1], index: 4, kind: output, shape index: {2}]
  %5 = xla_tuple %s2, %s3, %s4
  %s6 = sld [smem:[#allocation0]]
  $region57: #{conv_down_pallas.1} parent=0
    _
  %s8 = ssub.s32 1, %s6
  %s9 = scalar_select 0, %s8, %s6
  loop: start=0, step=1, limit=4
  $region2: #{conv_down_pallas.1} parent=0 // loop_pre_header
    _
  $region3: #{conv_down_pallas.1} parent=0 // loop_header
    %s11 = sphi 0, %s15
    %p12 = scmp.ge.s32.totalorder %s11, 4
    %s18 = sphi 0, %s30
    %s19 = sphi 0, %s26
    %s20 = sphi 0, %s18
    %s21 = sphi 0, %s19
    %s22 = sphi 0, %s20
    %s23 = sphi 0, %s21
    %s31 = sphi 0, %s31
    %s33 = sphi 0, %s31
    %s34 = sphi 0, %s33
    %s48 = sphi 0, %s34
    %s56 = sphi 0, %s58
    %s59 = sphi 0, %s56
    %s60 = sphi 0, %s59
    %s76 = sphi 0, %s60
    %s84 = sphi 0, %s86
    %s87 = sphi 0, %s84
    %s88 = sphi 0, %s87
    %s104 = sphi 0, %s88
    %s112 = sphi 0, %s114
    %s115 = sphi 0, %s112
    %s116 = sphi 0, %s115
    %s132 = sphi 0, %s116
    %s140 = sphi 0, %s142
    %s143 = sphi 0, %s140
    %s144 = sphi 0, %s143
    %s160 = sphi 0, %s144
  $region4: #{conv_down_pallas.1} parent=0 // loop_header_branch
    %14 = sbr.rel (%p12) target = $region8
  $region5: #{conv_down_pallas.1} parent=0 // loop_body
    %s16 = ssub.s32 %s11, 1
    %s17 = ssub.s32 %s11, 2
    %s24 = sadd.s32 1, %s19
    %p25 = scmp.ge.s32.totalorder %s24, 1
    %s26 = scalar_select %p25, 0, %s24
    %s27 = sadd.s32 1, %s18
    %s28 = scalar_select %p25, %s27, %s18
    %p29 = scmp.ge.s32.totalorder %s28, 2
    %s30 = scalar_select %p29, 0, %s28
    %s32 = sadd.s32 %s31, 1
    %p35 = scmp.eq.s32.totalorder %s11, 1
    %p36 = scmp.ne.s32.totalorder %s31, %s33
    %p37 = scmp.eq.s32.totalorder %s11, 0
    %p38 = por %p36, %p37
    %p39 = scmp.ne.s32.totalorder %s31, %s33
    %p40 = scmp.eq.s32.totalorder %s16, 1
    %p41 = por %p39, %p40
    %p42 = scmp.ne.s32.totalorder %s33, %s34
    %p43 = scmp.eq.s32.totalorder %s16, 0
    %p44 = por %p42, %p43
    %p45 = scmp.ne.s32.totalorder %s33, %s34
    %p46 = scmp.eq.s32.totalorder %s17, 1
    %p47 = por %p45, %p46
    %p49 = scmp.ne.s32.totalorder %s34, %s48
    %p50 = scmp.eq.s32.totalorder %s17, 0
    %p51 = por %p49, %p50
    %s52 = ssub.s32 %s18, %s30
    %s53 = ssub.s32 %s19, %s26
    %s54 = sor.u32 %s52, %s53
    %p55 = scmp.eq.s32.totalorder %s54, 0
    %s57 = sadd.s32 %s56, 1
    %s58 = scalar_select %p55, %s56, %s57
    %p61 = pneg %p55
    %p62 = scmp.eq.s32.totalorder %s11, 1
    %p63 = por %p61, %p62
    %p64 = scmp.ne.s32.totalorder %s56, %s59
    %p65 = scmp.eq.s32.totalorder %s11, 0
    %p66 = por %p64, %p65
    %p67 = scmp.ne.s32.totalorder %s56, %s59
    %p68 = scmp.eq.s32.totalorder %s16, 1
    %p69 = por %p67, %p68
    %p70 = scmp.ne.s32.totalorder %s59, %s60
    %p71 = scmp.eq.s32.totalorder %s16, 0
    %p72 = por %p70, %p71
    %p73 = scmp.ne.s32.totalorder %s59, %s60
    %p74 = scmp.eq.s32.totalorder %s17, 1
    %p75 = por %p73, %p74
    %p77 = scmp.ne.s32.totalorder %s60, %s76
    %p78 = scmp.eq.s32.totalorder %s17, 0
    %p79 = por %p77, %p78
    %s80 = ssub.s32 %s18, %s30
    %s81 = ssub.s32 %s19, %s26
    %s82 = sor.u32 %s80, %s81
    %p83 = scmp.eq.s32.totalorder %s82, 0
    %s85 = sadd.s32 %s84, 1
    %s86 = scalar_select %p83, %s84, %s85
    %p89 = pneg %p83
    %p90 = scmp.eq.s32.totalorder %s11, 1
    %p91 = por %p89, %p90
    %p92 = scmp.ne.s32.totalorder %s84, %s87
    %p93 = scmp.eq.s32.totalorder %s11, 0
    %p94 = por %p92, %p93
    %p95 = scmp.ne.s32.totalorder %s84, %s87
    %p96 = scmp.eq.s32.totalorder %s16, 1
    %p97 = por %p95, %p96
    %p98 = scmp.ne.s32.totalorder %s87, %s88
    %p99 = scmp.eq.s32.totalorder %s16, 0
    %p100 = por %p98, %p99
    %p101 = scmp.ne.s32.totalorder %s87, %s88
    %p102 = scmp.eq.s32.totalorder %s17, 1
    %p103 = por %p101, %p102
    %p105 = scmp.ne.s32.totalorder %s88, %s104
    %p106 = scmp.eq.s32.totalorder %s17, 0
    %p107 = por %p105, %p106
    %s108 = ssub.s32 %s18, %s30
    %s109 = ssub.s32 %s19, %s26
    %s110 = sor.u32 %s108, %s109
    %p111 = scmp.eq.s32.totalorder %s110, 0
    %s113 = sadd.s32 %s112, 1
    %s114 = scalar_select %p111, %s112, %s113
    %p117 = pneg %p111
    %p118 = scmp.eq.s32.totalorder %s11, 1
    %p119 = por %p117, %p118
    %p120 = scmp.ne.s32.totalorder %s112, %s115
    %p121 = scmp.eq.s32.totalorder %s11, 0
    %p122 = por %p120, %p121
    %p123 = scmp.ne.s32.totalorder %s112, %s115
    %p124 = scmp.eq.s32.totalorder %s16, 1
    %p125 = por %p123, %p124
    %p126 = scmp.ne.s32.totalorder %s115, %s116
    %p127 = scmp.eq.s32.totalorder %s16, 0
    %p128 = por %p126, %p127
    %p129 = scmp.ne.s32.totalorder %s115, %s116
    %p130 = scmp.eq.s32.totalorder %s17, 1
    %p131 = por %p129, %p130
    %p133 = scmp.ne.s32.totalorder %s116, %s132
    %p134 = scmp.eq.s32.totalorder %s17, 0
    %p135 = por %p133, %p134
    %s136 = ssub.s32 %s18, %s30
    %s137 = ssub.s32 %s19, %s26
    %s138 = sor.u32 %s136, %s137
    %p139 = scmp.eq.s32.totalorder %s138, 0
    %s141 = sadd.s32 %s140, 1
    %s142 = scalar_select %p139, %s140, %s141
    %p145 = pneg %p139
    %p146 = scmp.eq.s32.totalorder %s11, 1
    %p147 = por %p145, %p146
    %p148 = scmp.ne.s32.totalorder %s140, %s143
    %p149 = scmp.eq.s32.totalorder %s11, 0
    %p150 = por %p148, %p149
    %p151 = scmp.ne.s32.totalorder %s140, %s143
    %p152 = scmp.eq.s32.totalorder %s16, 1
    %p153 = por %p151, %p152
    %p154 = scmp.ne.s32.totalorder %s143, %s144
    %p155 = scmp.eq.s32.totalorder %s16, 0
    %p156 = por %p154, %p155
    %p157 = scmp.ne.s32.totalorder %s143, %s144
    %p158 = scmp.eq.s32.totalorder %s17, 1
    %p159 = por %p157, %p158
    %p161 = scmp.ne.s32.totalorder %s144, %s160
    %p162 = scmp.eq.s32.totalorder %s17, 0
    %p163 = por %p161, %p162
    %p164 = scmp.le.s32.totalorder 1, %s11
    %p165 = scmp.lt.s32.totalorder %s11, 3
    %p166 = pnand %p164, %p165
    %p167 = pneg %p166
    // Predicated region
    $region9: #{conv_down_pallas.1} parent=5 // pred_check
      _
    $region10: #{conv_down_pallas.1} parent=5 // pred_check_branch
      %169 = sbr.rel (%p166) target = $region12
    $region11: #{conv_down_pallas.1} parent=5 // pred_region
      %s170 = ssub.s32 %s11, 1
      // Predicated region
      $region13: #{conv_down_pallas.1} parent=11 // pred_check
        %p171 = pneg %p44
      $region14: #{conv_down_pallas.1} parent=11 // pred_check_branch
        %173 = sbr.rel (%p171) target = $region16
      $region15: #{conv_down_pallas.1} parent=11 // pred_region
        _
      $region16: #{conv_down_pallas.1} parent=11 // pred_fallthru
        _
    $region12: #{conv_down_pallas.1} parent=5 // pred_fallthru
      _
    %p174 = scmp.lt.s32.totalorder %s11, 2
    // Predicated region
    $region17: #{conv_down_pallas.1} parent=5 // pred_check
      %p175 = pneg %p174
    $region18: #{conv_down_pallas.1} parent=5 // pred_check_branch
      %177 = sbr.rel (%p175) target = $region20
    $region19: #{conv_down_pallas.1} parent=5 // pred_region
      // Predicated region
      $region21: #{conv_down_pallas.1} parent=19 // pred_check
        %p178 = pneg %p66
      $region22: #{conv_down_pallas.1} parent=19 // pred_check_branch
        %180 = sbr.rel (%p178) target = $region24
      $region23: #{conv_down_pallas.1} parent=19 // pred_region
        %s181 = smul.u32 4, %s19
        %p182 = scmp.lt.s32.totalorder %s18, 1
        %s183 = scalar_select %p182, %s18, 1
        %p184 = scmp.lt.s32.totalorder %s181, 3
        %s185 = scalar_select %p184, %s181, 3
        %s186 = smul.addr %s183, 56
        %s187 = sadd.s32 %s185, %s186
        %s188 = smul.addr %s187, 8
        %s189 = scalar_lea.vmem %s1, %s188
        %s190 = smul.u32 4, %s19
      $region24: #{conv_down_pallas.1} parent=19 // pred_fallthru
        _
    $region20: #{conv_down_pallas.1} parent=5 // pred_fallthru
      _
    %p191 = scmp.le.s32.totalorder 1, %s11
    %p192 = scmp.lt.s32.totalorder %s11, 3
    %p193 = pnand %p191, %p192
    %p194 = pneg %p193
    // Predicated region
    $region25: #{conv_down_pallas.1} parent=5 // pred_check
      _
    $region26: #{conv_down_pallas.1} parent=5 // pred_check_branch
      %196 = sbr.rel (%p193) target = $region28
    $region27: #{conv_down_pallas.1} parent=5 // pred_region
      %s197 = ssub.s32 %s11, 1
      %p198 = pneg %p44
      %p199 = pneg %p41
      %s200 = smul.u32 4, %s21
      %p201 = scmp.lt.s32.totalorder %s20, 1
      %s202 = scalar_select %p201, %s20, 1
      %p203 = scmp.lt.s32.totalorder %s200, 3
      %s204 = scalar_select %p203, %s200, 3
      %s205 = smul.addr %s202, 56
      %s206 = sadd.s32 %s204, %s205
      %s207 = smul.addr %s206, 8
      %s208 = scalar_lea.vmem %s1, %s207
      %p209 = pneg %p72
      %p210 = pneg %p69
      %p211 = pneg %p100
      %p212 = pneg %p97
      %s213 = smul.u32 4, %s21
      %p214 = scmp.lt.s32.totalorder %s20, 1
      %s215 = scalar_select %p214, %s20, 1
      %p216 = scmp.lt.s32.totalorder %s213, 3
      %s217 = scalar_select %p216, %s213, 3
      %s218 = smul.addr %s215, 4
      %s219 = sadd.s32 %s217, %s218
      %s220 = smul.addr %s219, 8
      %s221 = scalar_lea.vmem %s2, %s220
      %p222 = pneg %p128
      %p223 = pneg %p125
      %p224 = scmp.lt.s32.totalorder %s20, 1
      %s225 = scalar_select %p224, %s20, 1
      %p226 = scmp.lt.s32.totalorder %s21, 0
      %s227 = scalar_select %p226, %s21, 0
      %s228 = sadd.s32 %s227, %s225
      %s229 = smul.addr %s228, 8
      %s230 = scalar_lea.vmem %s3, %s229
      %p231 = pneg %p156
      %p232 = pneg %p153
      %p233 = scmp.lt.s32.totalorder %s20, 1
      %s234 = scalar_select %p233, %s20, 1
      %p235 = scmp.lt.s32.totalorder %s21, 0
      %s236 = scalar_select %p235, %s21, 0
      %s237 = sadd.s32 %s236, %s234
      %s238 = smul.addr %s237, 8
      %s239 = scalar_lea.vmem %s4, %s238
      %s240 = smul.u32 4, %s21
      %p241 = scmp.lt.s32.totalorder %s20, 1
      %s242 = scalar_select %p241, %s20, 1
      %p243 = scmp.lt.s32.totalorder %s240, 3
      %s244 = scalar_select %p243, %s240, 3
      %s245 = smul.addr %s242, 56
      %s246 = sadd.s32 %s244, %s245
      %s247 = smul.addr %s246, 8
      %s248 = scalar_lea.vmem %s1, %s247
      %s249 = smul.u32 4, %s21
      %s250 = smul.u32 4, %s21
      %p251 = scmp.lt.s32.totalorder %s20, 1
      %s252 = scalar_select %p251, %s20, 1
      %p253 = scmp.lt.s32.totalorder %s250, 3
      %s254 = scalar_select %p253, %s250, 3
      %s255 = smul.addr %s252, 4
      %s256 = sadd.s32 %s254, %s255
      %s257 = smul.addr %s256, 8
      %s258 = scalar_lea.vmem %s2, %s257
      %s259 = smul.u32 4, %s21
      %p260 = scmp.lt.s32.totalorder %s20, 1
      %s261 = scalar_select %p260, %s20, 1
      %p262 = scmp.lt.s32.totalorder %s21, 0
      %s263 = scalar_select %p262, %s21, 0
      %s264 = sadd.s32 %s263, %s261
      %s265 = smul.addr %s264, 8
      %s266 = scalar_lea.vmem %s3, %s265
      %p267 = scmp.lt.s32.totalorder %s20, 1
      %s268 = scalar_select %p267, %s20, 1
      %p269 = scmp.lt.s32.totalorder %s21, 0
      %s270 = scalar_select %p269, %s21, 0
      %s271 = sadd.s32 %s270, %s268
      %s272 = smul.addr %s271, 8
      %s273 = scalar_lea.vmem %s4, %s272
      %v274 = vld [vmem:[%s0] sm:$0xff]
      %v275 = vld [vmem:[%s248] sm:$0xff]
      %v276 = vld [vmem:[%s248 + $0x8] sm:$0xff]
      %v277 = vld [vmem:[%s248 + $0x10] sm:$0xff]
      %v278 = vld [vmem:[%s248 + $0x18] sm:$0xff]
      %v279 = vld [vmem:[%s248 + $0x20] sm:$0xff]
      %v280 = vld [vmem:[%s248 + $0x28] sm:$0xff]
      %v281 = vld [vmem:[%s248 + $0x30] sm:$0xff]
      %v282 = vld [vmem:[%s248 + $0x38] sm:$0xff]
      %v283 = vld [vmem:[%s248 + $0x40] sm:$0xff]
      %v284 = vld [vmem:[%s248 + $0x48] sm:$0xff]
      %v285 = vld [vmem:[%s248 + $0x50] sm:$0xff]
      %v286 = vld [vmem:[%s248 + $0x58] sm:$0xff]
      %v287 = vld [vmem:[%s248 + $0x60] sm:$0xff]
      %v288 = vld [vmem:[%s248 + $0x68] sm:$0xff]
      %v289 = vld [vmem:[%s248 + $0x70] sm:$0xff]
      %v290 = vld [vmem:[%s248 + $0x78] sm:$0xff]
      %v291 = vld [vmem:[%s248 + $0x80] sm:$0xff]
      %v292 = vld [vmem:[%s248 + $0x88] sm:$0xff]
      %v293 = vld [vmem:[%s248 + $0x90] sm:$0xff]
      %v294 = vld [vmem:[%s248 + $0x98] sm:$0xff]
      %v295 = vld [vmem:[%s248 + $0xa0] sm:$0xff]
      %v296 = vld [vmem:[%s248 + $0xa8] sm:$0xff]
      %v297 = vld [vmem:[%s248 + $0xb0] sm:$0xff]
      %v298 = vld [vmem:[%s248 + $0xb8] sm:$0xff]
      %v299 = vld [vmem:[%s248 + $0xc0] sm:$0xff]
      %v300 = vld [vmem:[%s248 + $0xc8] sm:$0xff]
      %v301 = vld [vmem:[%s248 + $0xd0] sm:$0xff]
      %v302 = vld [vmem:[%s248 + $0xd8] sm:$0xff]
      %v303 = vld [vmem:[%s248 + $0xe0] sm:$0xff]
      %v304 = vld [vmem:[%s248 + $0xe8] sm:$0xff]
      %v305 = vld [vmem:[%s248 + $0xf0] sm:$0xff]
      %v306 = vld [vmem:[%s248 + $0xf8] sm:$0xff]
      %v307 = vld [vmem:[%s248 + $0x100] sm:$0xff]
      %v308 = vld [vmem:[%s248 + $0x108] sm:$0xff]
      %v309 = vld [vmem:[%s248 + $0x110] sm:$0xff]
      %v310 = vld [vmem:[%s248 + $0x118] sm:$0xff]
      %v311 = vld [vmem:[%s248 + $0x120] sm:$0xff]
      %v312 = vld [vmem:[%s248 + $0x128] sm:$0xff]
      %v313 = vld [vmem:[%s248 + $0x130] sm:$0xff]
      %v314 = vld [vmem:[%s248 + $0x138] sm:$0xff]
      %v315 = vld [vmem:[%s248 + $0x140] sm:$0xff]
      %v316 = vld [vmem:[%s248 + $0x148] sm:$0xff]
      %v317 = vld [vmem:[%s248 + $0x150] sm:$0xff]
      %v318 = vld [vmem:[%s248 + $0x158] sm:$0xff]
      %v319 = vld [vmem:[%s248 + $0x160] sm:$0xff]
      %v320 = vld [vmem:[%s248 + $0x168] sm:$0xff]
      %v321 = vld [vmem:[%s248 + $0x170] sm:$0xff]
      %v322 = vld [vmem:[%s248 + $0x178] sm:$0xff]
      %v323 = vld [vmem:[%s248 + $0x180] sm:$0xff]
      %v324 = vld [vmem:[%s248 + $0x188] sm:$0xff]
      %v325 = vld [vmem:[%s248 + $0x190] sm:$0xff]
      %v326 = vld [vmem:[%s248 + $0x198] sm:$0xff]
      %v327 = vld [vmem:[%s248 + $0x1a0] sm:$0xf]
      %v328 = vld [vmem:[%s248 + $0x1a8] sm:$0xf]
      %v329 = vld [vmem:[%s248 + $0x1b0] sm:$0xf]
      %v330 = vld [vmem:[%s248 + $0x1b8] sm:$0xf]
      %vm331 = vcmask 883712
      %v333 = vsel %vm331, %v274, 0
      %vm335 = vcmask 1043456
      %v337 = vsel %vm335, %v327, 0
      %v340 = vsel %vm335, %v328, 0
      %v343 = vsel %vm335, %v329, 0
      %v346 = vsel %vm335, %v330, 0
      %348 = vmatprep.subr.mxu0 %v276
      %349 = vmatpush1.msra.mxu0 %v275
      %350 = vmatprep.subr.mxu0 %v280
      %351 = vmatpush1.msra.mxu0 %v279
      %352 = vmatprep.subr.mxu0 %v284
      %353 = vmatpush1.msra.mxu0 %v283
      %354 = vmatprep.subr.mxu0 %v288
      %355 = vmatpush1.msra.mxu0 %v287
      %356 = vmatprep.subr.mxu0 %v292
      %357 = vmatpush1.msra.mxu0 %v291
      %358 = vmatprep.subr.mxu0 %v296
      %359 = vmatpush1.msra.mxu0 %v295
      %360 = vmatprep.subr.mxu0 %v300
      %361 = vmatpush1.msra.mxu0 %v299
      %362 = vmatprep.subr.mxu0 %v304
      %363 = vmatpush1.msra.mxu0 %v303
      %364 = vmatprep.subr.mxu0 %v308
      %365 = vmatpush1.msra.mxu0 %v307
      %366 = vmatprep.subr.mxu0 %v312
      %367 = vmatpush1.msra.mxu0 %v311
      %368 = vmatprep.subr.mxu0 %v316
      %369 = vmatpush1.msra.mxu0 %v315
      %370 = vmatprep.subr.mxu0 %v320
      %371 = vmatpush1.msra.mxu0 %v319
      %372 = vmatprep.subr.mxu0 %v324
      %373 = vmatpush1.msra.mxu0 %v323
      %374 = vmatprep.subr.mxu0 %v340
      %375 = vmatpush1.msra.mxu0 %v337
      %376 = vmatprep.subr.mxu0 0.0
      %377 = vmatpush1.msra.mxu0 0.0
      %378 = vmatprep.subr.mxu0 0.0
      %379 = vmatpush1.msra.mxu0 0.0
      %380 = vmatprep.subr.mxu0 0.0
      %381 = vmatpush1.msra.mxu0 0.0
      %382 = vmatprep.subr.mxu0 0.0
      %383 = vmatpush1.msra.mxu0 0.0
      %384 = vmatprep.subr.mxu0 0.0
      %385 = vmatpush1.msra.mxu0 0.0
      %386 = vmatprep.subr.mxu0 0.0
      %387 = vmatpush1.msra.mxu0 0.0
      %388 = vmatprep.subr.mxu0 0.0
      %389 = vmatpush1.msra.mxu0 0.0
      %390 = vmatprep.subr.mxu0 0.0
      %391 = vmatpush1.msra.mxu0 0.0
      %392 = vmatprep.subr.mxu0 0.0
      %393 = vmatpush1.msra.mxu0 0.0
      %394 = vmatprep.subr.mxu0 0.0
      %395 = vmatpush1.msra.mxu0 0.0
      %396 = vmatprep.subr.mxu0 0.0
      %397 = vmatpush1.msra.mxu0 0.0
      %398 = vmatprep.subr.mxu0 0.0
      %399 = vmatpush1.msra.mxu0 0.0
      %400 = vmatprep.subr.mxu0 0.0
      %401 = vmatpush1.msra.mxu0 0.0
      %402 = vmatprep.subr.mxu0 0.0
      %403 = vmatpush1.msra.mxu0 0.0
      %404 = vmatprep.subr.mxu0 0.0
      %405 = vmatpush1.msra.mxu0 0.0
      %406 = vmatprep.subr.mxu0 0.0
      %407 = vmatpush1.msra.mxu0 0.0
      %408 = vmatprep.subr.mxu0 0.0
      %409 = vmatpush1.msra.mxu0 0.0
      %410 = vmatprep.subr.mxu0 0.0
      %411 = vmatpush1.msra.mxu0 0.0
      %412 = vmatprep.mubr.f32.mxu0 0.0
      %413 = vmatmul.mubr.f32.gmra.mrb[0].mxu0 %v333
      %v414 = vpop.f32.mrb[0].mxu0
      %v415 = vadd.f32 0.0, %v414
      %v416 = vpop.f32.mrb[0].mxu0
      %v417 = vadd.f32 0.0, %v416
      %418 = vdwg.mxu0
      %419 = vmatprep.subr.mxu0 %v278
      %420 = vmatpush1.msra.mxu0 %v277
      %421 = vmatprep.subr.mxu0 %v282
      %422 = vmatpush1.msra.mxu0 %v281
      %423 = vmatprep.subr.mxu0 %v286
      %424 = vmatpush1.msra.mxu0 %v285
      %425 = vmatprep.subr.mxu0 %v290
      %426 = vmatpush1.msra.mxu0 %v289
      %427 = vmatprep.subr.mxu0 %v294
      %428 = vmatpush1.msra.mxu0 %v293
      %429 = vmatprep.subr.mxu0 %v298
      %430 = vmatpush1.msra.mxu0 %v297
      %431 = vmatprep.subr.mxu0 %v302
      %432 = vmatpush1.msra.mxu0 %v301
      %433 = vmatprep.subr.mxu0 %v306
      %434 = vmatpush1.msra.mxu0 %v305
      %435 = vmatprep.subr.mxu0 %v310
      %436 = vmatpush1.msra.mxu0 %v309
      %437 = vmatprep.subr.mxu0 %v314
      %438 = vmatpush1.msra.mxu0 %v313
      %439 = vmatprep.subr.mxu0 %v318
      %440 = vmatpush1.msra.mxu0 %v317
      %441 = vmatprep.subr.mxu0 %v322
      %442 = vmatpush1.msra.mxu0 %v321
      %443 = vmatprep.subr.mxu0 %v326
      %444 = vmatpush1.msra.mxu0 %v325
      %445 = vmatprep.subr.mxu0 %v346
      %446 = vmatpush1.msra.mxu0 %v343
      %447 = vmatprep.subr.mxu0 0.0
      %448 = vmatpush1.msra.mxu0 0.0
      %449 = vmatprep.subr.mxu0 0.0
      %450 = vmatpush1.msra.mxu0 0.0
      %451 = vmatprep.subr.mxu0 0.0
      %452 = vmatpush1.msra.mxu0 0.0
      %453 = vmatprep.subr.mxu0 0.0
      %454 = vmatpush1.msra.mxu0 0.0
      %455 = vmatprep.subr.mxu0 0.0
      %456 = vmatpush1.msra.mxu0 0.0
      %457 = vmatprep.subr.mxu0 0.0
      %458 = vmatpush1.msra.mxu0 0.0
      %459 = vmatprep.subr.mxu0 0.0
      %460 = vmatpush1.msra.mxu0 0.0
      %461 = vmatprep.subr.mxu0 0.0
      %462 = vmatpush1.msra.mxu0 0.0
      %463 = vmatprep.subr.mxu0 0.0
      %464 = vmatpush1.msra.mxu0 0.0
      %465 = vmatprep.subr.mxu0 0.0
      %466 = vmatpush1.msra.mxu0 0.0
      %467 = vmatprep.subr.mxu0 0.0
      %468 = vmatpush1.msra.mxu0 0.0
      %469 = vmatprep.subr.mxu0 0.0
      %470 = vmatpush1.msra.mxu0 0.0
      %471 = vmatprep.subr.mxu0 0.0
      %472 = vmatpush1.msra.mxu0 0.0
      %473 = vmatprep.subr.mxu0 0.0
      %474 = vmatpush1.msra.mxu0 0.0
      %475 = vmatprep.subr.mxu0 0.0
      %476 = vmatpush1.msra.mxu0 0.0
      %477 = vmatprep.subr.mxu0 0.0
      %478 = vmatpush1.msra.mxu0 0.0
      %479 = vmatprep.subr.mxu0 0.0
      %480 = vmatpush1.msra.mxu0 0.0
      %481 = vmatprep.subr.mxu0 0.0
      %482 = vmatpush1.msra.mxu0 0.0
      %483 = vmatprep.mubr.f32.mxu0 0.0
      %484 = vmatmul.mubr.f32.gmra.mrb[0].mxu0 %v333
      %v485 = vpop.f32.mrb[0].mxu0
      %v486 = vadd.f32 0.0, %v485
      %v487 = vpop.f32.mrb[0].mxu0
      %v488 = vadd.f32 0.0, %v487
      %489 = vdwg.mxu0
      %490 = vst [vmem:[%s258] sm:$0xff] %v415
      %491 = vst [vmem:[%s258 + $0x8] sm:$0xff] %v417
      %492 = vst [vmem:[%s258 + $0x10] sm:$0xff] %v486
      %493 = vst [vmem:[%s258 + $0x18] sm:$0xff] %v488
      %v494 = vadd.f32 %v415, %v417
      %v495 = vadd.f32 %v494, %v486
      %v496 = vadd.f32 %v495, %v488
      %497 = vadd.xlane.f32.xlu0 %v496
      %v498 = vpop.xlane.xlu0 %497
      %vm499 = vcmask 7168
      %500 = vst.msk [vmem:[%s266] sm:$0xff] %vm499, %v498
      %v501 = vmul.f32 %v415, %v415
      %v502 = vmul.f32 %v417, %v417
      %v503 = vmul.f32 %v486, %v486
      %v504 = vmul.f32 %v488, %v488
      %v505 = vadd.f32 %v501, %v502
      %v506 = vadd.f32 %v505, %v503
      %v507 = vadd.f32 %v506, %v504
      %508 = vadd.xlane.f32.xlu0 %v507
      %v509 = vpop.xlane.xlu0 %508
      %510 = vst.msk [vmem:[%s273] sm:$0xff] %vm499, %v509
      %s511 = smul.u32 4, %s21
      %p512 = scmp.lt.s32.totalorder %s20, 1
      %s513 = scalar_select %p512, %s20, 1
      %p514 = scmp.lt.s32.totalorder %s511, 3
      %s515 = scalar_select %p514, %s511, 3
      %s516 = smul.addr %s513, 4
      %s517 = sadd.s32 %s515, %s516
      %s518 = smul.addr %s517, 8
      %s519 = scalar_lea.vmem %s2, %s518
      %p520 = scmp.lt.s32.totalorder %s20, 1
      %s521 = scalar_select %p520, %s20, 1
      %p522 = scmp.lt.s32.totalorder %s21, 0
      %s523 = scalar_select %p522, %s21, 0
      %s524 = sadd.s32 %s523, %s521
      %s525 = smul.addr %s524, 8
      %s526 = scalar_lea.vmem %s3, %s525
      %p527 = scmp.lt.s32.totalorder %s20, 1
      %s528 = scalar_select %p527, %s20, 1
      %p529 = scmp.lt.s32.totalorder %s21, 0
      %s530 = scalar_select %p529, %s21, 0
      %s531 = sadd.s32 %s530, %s528
      %s532 = smul.addr %s531, 8
      %s533 = scalar_lea.vmem %s4, %s532
      // Predicated region
      $region29: #{conv_down_pallas.1} parent=27 // pred_check
        %p534 = pneg %p97
      $region30: #{conv_down_pallas.1} parent=27 // pred_check_branch
        %536 = sbr.rel (%p534) target = $region32
      $region31: #{conv_down_pallas.1} parent=27 // pred_region
        %s537 = smul.u32 4, %s21
      $region32: #{conv_down_pallas.1} parent=27 // pred_fallthru
        _
      // Predicated region
      $region33: #{conv_down_pallas.1} parent=27 // pred_check
        %p538 = pneg %p125
      $region34: #{conv_down_pallas.1} parent=27 // pred_check_branch
        %540 = sbr.rel (%p538) target = $region36
      $region35: #{conv_down_pallas.1} parent=27 // pred_region
        _
      $region36: #{conv_down_pallas.1} parent=27 // pred_fallthru
        _
      // Predicated region
      $region37: #{conv_down_pallas.1} parent=27 // pred_check
        %p541 = pneg %p153
      $region38: #{conv_down_pallas.1} parent=27 // pred_check_branch
        %543 = sbr.rel (%p541) target = $region40
      $region39: #{conv_down_pallas.1} parent=27 // pred_region
        _
      $region40: #{conv_down_pallas.1} parent=27 // pred_fallthru
        _
    $region28: #{conv_down_pallas.1} parent=5 // pred_fallthru
      _
    %p544 = scmp.le.s32.totalorder 2, %s11
    // Predicated region
    $region41: #{conv_down_pallas.1} parent=5 // pred_check
      %p545 = pneg %p544
    $region42: #{conv_down_pallas.1} parent=5 // pred_check_branch
      %547 = sbr.rel (%p545) target = $region44
    $region43: #{conv_down_pallas.1} parent=5 // pred_region
      %s548 = ssub.s32 %s11, 2
      // Predicated region
      $region45: #{conv_down_pallas.1} parent=43 // pred_check
        %p549 = pneg %p103
      $region46: #{conv_down_pallas.1} parent=43 // pred_check_branch
        %551 = sbr.rel (%p549) target = $region48
      $region47: #{conv_down_pallas.1} parent=43 // pred_region
        %s552 = smul.u32 4, %s23
        %p553 = scmp.lt.s32.totalorder %s22, 1
        %s554 = scalar_select %p553, %s22, 1
        %p555 = scmp.lt.s32.totalorder %s552, 3
        %s556 = scalar_select %p555, %s552, 3
        %s557 = smul.addr %s554, 4
        %s558 = sadd.s32 %s556, %s557
        %s559 = smul.addr %s558, 8
        %s560 = scalar_lea.vmem %s2, %s559
      $region48: #{conv_down_pallas.1} parent=43 // pred_fallthru
        _
      // Predicated region
      $region49: #{conv_down_pallas.1} parent=43 // pred_check
        %p561 = pneg %p131
      $region50: #{conv_down_pallas.1} parent=43 // pred_check_branch
        %563 = sbr.rel (%p561) target = $region52
      $region51: #{conv_down_pallas.1} parent=43 // pred_region
        %p564 = scmp.lt.s32.totalorder %s22, 1
        %s565 = scalar_select %p564, %s22, 1
        %p566 = scmp.lt.s32.totalorder %s23, 0
        %s567 = scalar_select %p566, %s23, 0
        %s568 = sadd.s32 %s567, %s565
        %s569 = smul.addr %s568, 8
        %s570 = scalar_lea.vmem %s3, %s569
      $region52: #{conv_down_pallas.1} parent=43 // pred_fallthru
        _
      // Predicated region
      $region53: #{conv_down_pallas.1} parent=43 // pred_check
        %p571 = pneg %p159
      $region54: #{conv_down_pallas.1} parent=43 // pred_check_branch
        %573 = sbr.rel (%p571) target = $region56
      $region55: #{conv_down_pallas.1} parent=43 // pred_region
        %p574 = scmp.lt.s32.totalorder %s22, 1
        %s575 = scalar_select %p574, %s22, 1
        %p576 = scmp.lt.s32.totalorder %s23, 0
        %s577 = scalar_select %p576, %s23, 0
        %s578 = sadd.s32 %s577, %s575
        %s579 = smul.addr %s578, 8
        %s580 = scalar_lea.vmem %s4, %s579
      $region56: #{conv_down_pallas.1} parent=43 // pred_fallthru
        _
    $region44: #{conv_down_pallas.1} parent=5 // pred_fallthru
      _
  $region6: #{conv_down_pallas.1} parent=0 // loop_footer
    %s15 = sadd.s32 1, %s11
  $region7: #{conv_down_pallas.1} parent=0 // loop_footer_branch
    %10 = sbr.rel target = $region3
  $region8: #{conv_down_pallas.1} parent=0 // loop_exit
    _

</llo_original>
